<compile_context>
chip_gen: v7x
topology: tpu7x:2x2x1
jax: 0.10.0
libtpu: 0.0.40
codegen_flags: <defaults>
</compile_context>

<pallas_src>
from functools import partial

import jax
import jax.numpy as jnp
from jax.experimental import pallas as pl
from jax.experimental.pallas import tpu as pltpu

HIDDEN = 256
LANE = 128      # TPU lane width (last dim of a vreg)
SUBLANE = 8     # TPU sublane count


def _round_up(x, m):
    return (x + m - 1) // m * m


def policy_kernel(x_ref, w1_ref, b1_ref, w2_ref, b2_ref, w3_ref, b3_ref,
                  logstd_ref, eps_ref, out_ref):
    # Fused 3-layer MLP + relu + reparameterized sampling for one batch tile.
    x = x_ref[...]
    h1 = jnp.dot(x, w1_ref[...], preferred_element_type=jnp.float32) + b1_ref[...]
    h1 = jnp.maximum(h1, 0.0)
    h2 = jnp.dot(h1, w2_ref[...], preferred_element_type=jnp.float32) + b2_ref[...]
    h2 = jnp.maximum(h2, 0.0)
    mean = jnp.dot(h2, w3_ref[...], preferred_element_type=jnp.float32) + b3_ref[...]
    std = jnp.exp(logstd_ref[...])              # (1, out_pad), row-broadcast; EUP slot
    out_ref[...] = mean + eps_ref[...] * std


@partial(jax.jit, static_argnames=("batch_tile",))
def policy_forward(x, params, eps, *, batch_tile=256):
    """x: [B, input_dim] f32, eps: [B, output_dim] f32 -> actions [B, output_dim]."""
    w1, b1, w2, b2, w3, b3, log_std = params
    B, in_dim = x.shape
    hidden = w1.shape[1]
    out_dim = w3.shape[1]

    # Lane-dense output columns (pad 8 -> 128) and sublane/MXU-aligned batch tile.
    out_pad = _round_up(out_dim, LANE)
    tb = batch_tile if B >= batch_tile else _round_up(B, SUBLANE)
    b_pad = _round_up(B, tb)

    def pad_to(a, shape):
        return jnp.pad(a, [(0, t - s) for s, t in zip(a.shape, shape)])

    x_p = pad_to(x, (b_pad, in_dim))
    eps_p = pad_to(eps, (b_pad, out_pad))
    w3_p = pad_to(w3, (hidden, out_pad))
    b3_p = pad_to(b3, (1, out_pad))
    log_std_p = pad_to(log_std, (1, out_pad))

    grid = (b_pad // tb,)

    def batch_spec(cols):
        # Batch-tiled activations: block index advances with the grid step.
        return pl.BlockSpec((tb, cols), lambda i: (i, 0))

    def const_spec(shape):
        # Weights/biases: constant block index -> fetched once, VMEM-resident.
        return pl.BlockSpec(shape, lambda i: (0, 0))

    out = pl.pallas_call(
        policy_kernel,
        out_shape=jax.ShapeDtypeStruct((b_pad, out_pad), jnp.float32),
        grid=grid,
        in_specs=[
            batch_spec(in_dim),
            const_spec(w1.shape), const_spec(b1.shape),
            const_spec(w2.shape), const_spec(b2.shape),
            const_spec((hidden, out_pad)), const_spec((1, out_pad)),
            const_spec((1, out_pad)),
            batch_spec(out_pad),
        ],
        out_specs=batch_spec(out_pad),
        compiler_params=pltpu.CompilerParams(
            dimension_semantics=("parallel",)),
    )(x_p, w1, b1, w2, b2, w3_p, b3_p, log_std_p, eps_p)

    return out[:B, :out_dim]


def init_params(key, input_dim, output_dim, hidden=HIDDEN):
    """Deterministic synthetic init (PyTorch-style uniform bounds, [in, out] layout)."""
    ks = jax.random.split(key, 6)

    def linear(kw, kb, fan_in, fan_out):
        bound = 1.0 / jnp.sqrt(fan_in)
        w = jax.random.uniform(kw, (fan_in, fan_out), jnp.float32, -bound, bound)
        b = jax.random.uniform(kb, (1, fan_out), jnp.float32, -bound, bound)
        return w, b

    w1, b1 = linear(ks[0], ks[1], input_dim, hidden)
    w2, b2 = linear(ks[2], ks[3], hidden, hidden)
    w3, b3 = linear(ks[4], ks[5], hidden, output_dim)
    log_std = jnp.zeros((1, output_dim), jnp.float32)   # nn.Parameter(torch.zeros(output_dim))
    return (w1, b1, w2, b2, w3, b3, log_std)


def reference_forward(x, params, eps):
    w1, b1, w2, b2, w3, b3, log_std = params
    h1 = jax.nn.relu(x @ w1 + b1)
    h2 = jax.nn.relu(h1 @ w2 + b2)
    mean = h2 @ w3 + b3
    return mean + eps * jnp.exp(log_std)


if __name__ == "__main__":
    key = jax.random.PRNGKey(0)
    k_param, k_x, k_eps, k_x2, k_eps2 = jax.random.split(key, 5)

    input_dim, output_dim = 16, 8
    params = init_params(k_param, input_dim, output_dim)

    # Small spec-sized case (batch=2): single sublane-aligned batch tile.
    batch = 2
    x = jax.random.normal(k_x, (batch, input_dim), jnp.float32)
    eps = jax.random.normal(k_eps, (batch, output_dim), jnp.float32)  # torch.randn_like(std)
    actions = policy_forward(x, params, eps)
    jax.block_until_ready(actions)
    ref = reference_forward(x, params, eps)
    assert actions.shape == (batch, output_dim)
    assert jnp.allclose(actions, ref, atol=1e-5, rtol=1e-5)

    # reparameterize=False path: actions == mean (eps = 0).
    actions_det = policy_forward(x, params, jnp.zeros_like(eps))
    jax.block_until_ready(actions_det)
    ref_det = reference_forward(x, params, jnp.zeros_like(eps))
    assert jnp.allclose(actions_det, ref_det, atol=1e-5, rtol=1e-5)

    # Larger batch exercising the multi-step batch grid (2 tiles of 256 rows + padding).
    batch2 = 384
    x2 = jax.random.normal(k_x2, (batch2, input_dim), jnp.float32)
    eps2 = jax.random.normal(k_eps2, (batch2, output_dim), jnp.float32)
    actions2 = policy_forward(x2, params, eps2, batch_tile=256)
    jax.block_until_ready(actions2)
    ref2 = reference_forward(x2, params, eps2)
    assert actions2.shape == (batch2, output_dim)
    assert jnp.allclose(actions2, ref2, atol=1e-5, rtol=1e-5)

    print("KERNEL_OK")
</pallas_src>

<mosaic_0001>
module attributes {stable_mosaic.version = 11 : i64} {
  func.func @policy_kernel(%arg0: i32, %arg1: memref<8x16xf32, #tpu.memory_space<vmem>>, %arg2: memref<16x256xf32, #tpu.memory_space<vmem>>, %arg3: memref<1x256xf32, #tpu.memory_space<vmem>>, %arg4: memref<256x256xf32, #tpu.memory_space<vmem>>, %arg5: memref<1x256xf32, #tpu.memory_space<vmem>>, %arg6: memref<256x128xf32, #tpu.memory_space<vmem>>, %arg7: memref<1x128xf32, #tpu.memory_space<vmem>>, %arg8: memref<1x128xf32, #tpu.memory_space<vmem>>, %arg9: memref<8x128xf32, #tpu.memory_space<vmem>>, %arg10: memref<8x128xf32, #tpu.memory_space<vmem>>) attributes {dimension_semantics = [#tpu.dimension_semantics<parallel>], iteration_bounds = array<i64: 1>, scalar_prefetch = 0 : i64, scratch_operands = 0 : i64, tpu.core_type = #tpu.core_type<tc>, window_params = [{transform_indices = @transform_0, window_bounds = array<i64: 8, 16>}, {pipeline_mode = #tpu.pipeline_mode<synchronous>, transform_indices = @transform_1, window_bounds = array<i64: 16, 256>}, {pipeline_mode = #tpu.pipeline_mode<synchronous>, transform_indices = @transform_2, window_bounds = array<i64: 1, 256>}, {pipeline_mode = #tpu.pipeline_mode<synchronous>, transform_indices = @transform_3, window_bounds = array<i64: 256, 256>}, {pipeline_mode = #tpu.pipeline_mode<synchronous>, transform_indices = @transform_4, window_bounds = array<i64: 1, 256>}, {pipeline_mode = #tpu.pipeline_mode<synchronous>, transform_indices = @transform_5, window_bounds = array<i64: 256, 128>}, {pipeline_mode = #tpu.pipeline_mode<synchronous>, transform_indices = @transform_6, window_bounds = array<i64: 1, 128>}, {pipeline_mode = #tpu.pipeline_mode<synchronous>, transform_indices = @transform_7, window_bounds = array<i64: 1, 128>}, {transform_indices = @transform_8, window_bounds = array<i64: 8, 128>}, {transform_indices = @transform_9, window_bounds = array<i64: 8, 128>}]} {
    %c0 = arith.constant 0 : index
    %c0_0 = arith.constant 0 : index
    %0 = vector.load %arg1[%c0, %c0_0] : memref<8x16xf32, #tpu.memory_space<vmem>>, vector<8x16xf32>
    %c0_1 = arith.constant 0 : index
    %c0_2 = arith.constant 0 : index
    %1 = vector.load %arg2[%c0_1, %c0_2] : memref<16x256xf32, #tpu.memory_space<vmem>>, vector<16x256xf32>
    %cst = arith.constant dense<0.000000e+00> : vector<8x256xf32>
    %2 = tpu.matmul %0, %1, %cst {dimension_numbers = #tpu.dot_dimension_numbers<[1], [0], [0], [1], [0, 0, 1, 1], [], []>} : vector<8x16xf32>, vector<16x256xf32>, vector<8x256xf32> -> vector<8x256xf32>
    %c0_3 = arith.constant 0 : index
    %c0_4 = arith.constant 0 : index
    %3 = vector.load %arg3[%c0_3, %c0_4] : memref<1x256xf32, #tpu.memory_space<vmem>>, vector<1x256xf32>
    %4 = vector.broadcast %3 : vector<1x256xf32> to vector<8x256xf32>
    %5 = arith.addf %2, %4 : vector<8x256xf32>
    %cst_5 = arith.constant 0.000000e+00 : f32
    %6 = vector.broadcast %cst_5 : f32 to vector<8x256xf32>
    %7 = arith.maximumf %5, %6 : vector<8x256xf32>
    %c0_6 = arith.constant 0 : index
    %c0_7 = arith.constant 0 : index
    %8 = vector.load %arg4[%c0_6, %c0_7] : memref<256x256xf32, #tpu.memory_space<vmem>>, vector<256x256xf32>
    %cst_8 = arith.constant dense<0.000000e+00> : vector<8x256xf32>
    %9 = tpu.matmul %7, %8, %cst_8 {dimension_numbers = #tpu.dot_dimension_numbers<[1], [0], [0], [1], [0, 0, 1, 1], [], []>} : vector<8x256xf32>, vector<256x256xf32>, vector<8x256xf32> -> vector<8x256xf32>
    %c0_9 = arith.constant 0 : index
    %c0_10 = arith.constant 0 : index
    %10 = vector.load %arg5[%c0_9, %c0_10] : memref<1x256xf32, #tpu.memory_space<vmem>>, vector<1x256xf32>
    %11 = vector.broadcast %10 : vector<1x256xf32> to vector<8x256xf32>
    %12 = arith.addf %9, %11 : vector<8x256xf32>
    %cst_11 = arith.constant 0.000000e+00 : f32
    %13 = vector.broadcast %cst_11 : f32 to vector<8x256xf32>
    %14 = arith.maximumf %12, %13 : vector<8x256xf32>
    %c0_12 = arith.constant 0 : index
    %c0_13 = arith.constant 0 : index
    %15 = vector.load %arg6[%c0_12, %c0_13] : memref<256x128xf32, #tpu.memory_space<vmem>>, vector<256x128xf32>
    %cst_14 = arith.constant dense<0.000000e+00> : vector<8x128xf32>
    %16 = tpu.matmul %14, %15, %cst_14 {dimension_numbers = #tpu.dot_dimension_numbers<[1], [0], [0], [1], [0, 0, 1, 1], [], []>} : vector<8x256xf32>, vector<256x128xf32>, vector<8x128xf32> -> vector<8x128xf32>
    %c0_15 = arith.constant 0 : index
    %c0_16 = arith.constant 0 : index
    %17 = vector.load %arg7[%c0_15, %c0_16] : memref<1x128xf32, #tpu.memory_space<vmem>>, vector<1x128xf32>
    %18 = vector.broadcast %17 : vector<1x128xf32> to vector<8x128xf32>
    %19 = arith.addf %16, %18 : vector<8x128xf32>
    %c0_17 = arith.constant 0 : index
    %c0_18 = arith.constant 0 : index
    %20 = vector.load %arg8[%c0_17, %c0_18] : memref<1x128xf32, #tpu.memory_space<vmem>>, vector<1x128xf32>
    %21 = math.exp %20 : vector<1x128xf32>
    %c0_19 = arith.constant 0 : index
    %c0_20 = arith.constant 0 : index
    %22 = vector.load %arg9[%c0_19, %c0_20] : memref<8x128xf32, #tpu.memory_space<vmem>>, vector<8x128xf32>
    %23 = vector.broadcast %21 : vector<1x128xf32> to vector<8x128xf32>
    %24 = arith.mulf %22, %23 : vector<8x128xf32>
    %25 = arith.addf %19, %24 : vector<8x128xf32>
    %c0_21 = arith.constant 0 : index
    %c0_22 = arith.constant 0 : index
    %26 = vector.load %arg10[%c0_21, %c0_22] : memref<8x128xf32, #tpu.memory_space<vmem>>, vector<8x128xf32>
    tpu.vector_store %arg10[%c0_21, %c0_22], %25 {strides = array<i32>} : memref<8x128xf32, #tpu.memory_space<vmem>>, vector<8x128xf32>,
    return
  }
  func.func @transform_0(%arg0: i32) -> (i32, i32) {
    %c0_i32 = arith.constant 0 : i32
    %c0_i32_0 = arith.constant 0 : i32
    return %arg0, %c0_i32 : i32, i32
  }
  func.func @transform_1(%arg0: i32) -> (i32, i32) {
    %c0_i32 = arith.constant 0 : i32
    %c0_i32_0 = arith.constant 0 : i32
    %c0_i32_1 = arith.constant 0 : i32
    return %c0_i32, %c0_i32_0 : i32, i32
  }
  func.func @transform_2(%arg0: i32) -> (i32, i32) {
    %c0_i32 = arith.constant 0 : i32
    %c0_i32_0 = arith.constant 0 : i32
    %c0_i32_1 = arith.constant 0 : i32
    return %c0_i32, %c0_i32_0 : i32, i32
  }
  func.func @transform_3(%arg0: i32) -> (i32, i32) {
    %c0_i32 = arith.constant 0 : i32
    %c0_i32_0 = arith.constant 0 : i32
    %c0_i32_1 = arith.constant 0 : i32
    return %c0_i32, %c0_i32_0 : i32, i32
  }
  func.func @transform_4(%arg0: i32) -> (i32, i32) {
    %c0_i32 = arith.constant 0 : i32
    %c0_i32_0 = arith.constant 0 : i32
    %c0_i32_1 = arith.constant 0 : i32
    return %c0_i32, %c0_i32_0 : i32, i32
  }
  func.func @transform_5(%arg0: i32) -> (i32, i32) {
    %c0_i32 = arith.constant 0 : i32
    %c0_i32_0 = arith.constant 0 : i32
    %c0_i32_1 = arith.constant 0 : i32
    return %c0_i32, %c0_i32_0 : i32, i32
  }
  func.func @transform_6(%arg0: i32) -> (i32, i32) {
    %c0_i32 = arith.constant 0 : i32
    %c0_i32_0 = arith.constant 0 : i32
    %c0_i32_1 = arith.constant 0 : i32
    return %c0_i32, %c0_i32_0 : i32, i32
  }
  func.func @transform_7(%arg0: i32) -> (i32, i32) {
    %c0_i32 = arith.constant 0 : i32
    %c0_i32_0 = arith.constant 0 : i32
    %c0_i32_1 = arith.constant 0 : i32
    return %c0_i32, %c0_i32_0 : i32, i32
  }
  func.func @transform_8(%arg0: i32) -> (i32, i32) {
    %c0_i32 = arith.constant 0 : i32
    %c0_i32_0 = arith.constant 0 : i32
    return %arg0, %c0_i32 : i32, i32
  }
  func.func @transform_9(%arg0: i32) -> (i32, i32) {
    %c0_i32 = arith.constant 0 : i32
    %c0_i32_0 = arith.constant 0 : i32
    return %arg0, %c0_i32 : i32, i32
  }
}

</mosaic_0001>

<llo_original>
// kernel: policy_forward.1
$region0: #{policy_forward.1}
  #allocation0 [shape = 'u32[]', space=smem, size = 0x4, offset = 0x4, fixed_abs, tag = 'smem constant byte address 0x4 - core index']
  #allocation1 [shape = 'u32[144,128]{1,0:T(1,128)}', space=vmem, size = 0x12000, scoped, tag = 'internal scratch']
  %s0 = inlined_call_operand.vmem [shape: f32[8,16], index: 0, kind: input, shape index: {}]
  %s1 = inlined_call_operand.vmem [shape: f32[16,256], index: 1, kind: input, shape index: {}]
  %s2 = inlined_call_operand.vmem [shape: f32[1,256], index: 2, kind: input, shape index: {}]
  %s3 = inlined_call_operand.vmem [shape: f32[256,256], index: 3, kind: input, shape index: {}]
  %s4 = inlined_call_operand.vmem [shape: f32[1,256], index: 4, kind: input, shape index: {}]
  %s5 = inlined_call_operand.vmem [shape: f32[256,128], index: 5, kind: input, shape index: {}]
  %s6 = inlined_call_operand.vmem [shape: f32[1,128], index: 6, kind: input, shape index: {}]
  %s7 = inlined_call_operand.vmem [shape: f32[1,128], index: 7, kind: input, shape index: {}]
  %s8 = inlined_call_operand.vmem [shape: f32[8,128], index: 8, kind: input, shape index: {}]
  %s9 = inlined_call_operand.vmem [shape: f32[8,128], index: 9, kind: output, shape index: {}]
  %s10 = sld [smem:[#allocation0]]
  $region46: #{policy_forward.1} parent=0
    _
  %s12 = ssub.s32 1, %s10
  %s13 = scalar_select 0, %s12, %s10
  // Predicated region
  $region2: #{policy_forward.1} parent=0 // pred_check
    _
  $region3: #{policy_forward.1} parent=0 // pred_check_branch
    %15 = sbr.rel (0) target = $region5
  $region4: #{policy_forward.1} parent=0 // pred_region
    _
  $region5: #{policy_forward.1} parent=0 // pred_fallthru
    _
  // Predicated region
  $region6: #{policy_forward.1} parent=0 // pred_check
    _
  $region7: #{policy_forward.1} parent=0 // pred_check_branch
    %17 = sbr.rel (0) target = $region9
  $region8: #{policy_forward.1} parent=0 // pred_region
    _
  $region9: #{policy_forward.1} parent=0 // pred_fallthru
    _
  // Predicated region
  $region10: #{policy_forward.1} parent=0 // pred_check
    _
  $region11: #{policy_forward.1} parent=0 // pred_check_branch
    %19 = sbr.rel (0) target = $region13
  $region12: #{policy_forward.1} parent=0 // pred_region
    _
  $region13: #{policy_forward.1} parent=0 // pred_fallthru
    _
  // Predicated region
  $region14: #{policy_forward.1} parent=0 // pred_check
    _
  $region15: #{policy_forward.1} parent=0 // pred_check_branch
    %21 = sbr.rel (0) target = $region17
  $region16: #{policy_forward.1} parent=0 // pred_region
    _
  $region17: #{policy_forward.1} parent=0 // pred_fallthru
    _
  // Predicated region
  $region18: #{policy_forward.1} parent=0 // pred_check
    _
  $region19: #{policy_forward.1} parent=0 // pred_check_branch
    %23 = sbr.rel (0) target = $region21
  $region20: #{policy_forward.1} parent=0 // pred_region
    _
  $region21: #{policy_forward.1} parent=0 // pred_fallthru
    _
  // Predicated region
  $region22: #{policy_forward.1} parent=0 // pred_check
    _
  $region23: #{policy_forward.1} parent=0 // pred_check_branch
    %25 = sbr.rel (0) target = $region25
  $region24: #{policy_forward.1} parent=0 // pred_region
    _
  $region25: #{policy_forward.1} parent=0 // pred_fallthru
    _
  // Predicated region
  $region26: #{policy_forward.1} parent=0 // pred_check
    _
  $region27: #{policy_forward.1} parent=0 // pred_check_branch
    %27 = sbr.rel (0) target = $region29
  $region28: #{policy_forward.1} parent=0 // pred_region
    _
  $region29: #{policy_forward.1} parent=0 // pred_fallthru
    _
  // Predicated region
  $region30: #{policy_forward.1} parent=0 // pred_check
    _
  $region31: #{policy_forward.1} parent=0 // pred_check_branch
    %29 = sbr.rel (0) target = $region33
  $region32: #{policy_forward.1} parent=0 // pred_region
    _
  $region33: #{policy_forward.1} parent=0 // pred_fallthru
    _
  // Predicated region
  $region34: #{policy_forward.1} parent=0 // pred_check
    _
  $region35: #{policy_forward.1} parent=0 // pred_check_branch
    %31 = sbr.rel (0) target = $region37
  $region36: #{policy_forward.1} parent=0 // pred_region
    _
  $region37: #{policy_forward.1} parent=0 // pred_fallthru
    _
  %v32 = vld [vmem:[%s0] sm:$0xff]
  %v33 = vld [vmem:[%s1] sm:$0xff]
  %v34 = vld [vmem:[%s1 + $0x8] sm:$0xff]
  %v35 = vld [vmem:[%s1 + $0x10] sm:$0xff]
  %v36 = vld [vmem:[%s1 + $0x18] sm:$0xff]
  %v37 = vld [vmem:[%s2] sm:$0x3]
  %v39 = vlaneseq
  %v40 = vshrl.u32 %v39, 7
  %v41 = vsub.s32 0, %v40
  %v42 = vrot.slane %v37, %v41
  %v43 = vlaneseq
  %v44 = vshrl.u32 %v43, 7
  %v45 = vsub.s32 1, %v44
  %v46 = vrot.slane %v37, %v45
  %vm49 = vcmask 130048
  %v51 = vsel %vm49, %v32, 0
  %53 = vmatprep.subr.mxu0 %v34
  %54 = vmatpush1.msra.mxu0 %v33
  %55 = vmatprep.subr.mxu0 %v36
  %56 = vmatpush1.msra.mxu0 %v35
  %57 = vmatprep.subr.mxu0 0.0
  %58 = vmatpush1.msra.mxu0 0.0
  %59 = vmatprep.subr.mxu0 0.0
  %60 = vmatpush1.msra.mxu0 0.0
  %61 = vmatprep.subr.mxu0 0.0
  %62 = vmatpush1.msra.mxu0 0.0
  %63 = vmatprep.subr.mxu0 0.0
  %64 = vmatpush1.msra.mxu0 0.0
  %65 = vmatprep.subr.mxu0 0.0
  %66 = vmatpush1.msra.mxu0 0.0
  %67 = vmatprep.subr.mxu0 0.0
  %68 = vmatpush1.msra.mxu0 0.0
  %69 = vmatprep.subr.mxu0 0.0
  %70 = vmatpush1.msra.mxu0 0.0
  %71 = vmatprep.subr.mxu0 0.0
  %72 = vmatpush1.msra.mxu0 0.0
  %73 = vmatprep.subr.mxu0 0.0
  %74 = vmatpush1.msra.mxu0 0.0
  %75 = vmatprep.subr.mxu0 0.0
  %76 = vmatpush1.msra.mxu0 0.0
  %77 = vmatprep.subr.mxu0 0.0
  %78 = vmatpush1.msra.mxu0 0.0
  %79 = vmatprep.subr.mxu0 0.0
  %80 = vmatpush1.msra.mxu0 0.0
  %81 = vmatprep.subr.mxu0 0.0
  %82 = vmatpush1.msra.mxu0 0.0
  %83 = vmatprep.subr.mxu0 0.0
  %84 = vmatpush1.msra.mxu0 0.0
  %85 = vmatprep.subr.mxu0 0.0
  %86 = vmatpush1.msra.mxu0 0.0
  %87 = vmatprep.subr.mxu0 0.0
  %88 = vmatpush1.msra.mxu0 0.0
  %89 = vmatprep.subr.mxu0 0.0
  %90 = vmatpush1.msra.mxu0 0.0
  %91 = vmatprep.subr.mxu0 0.0
  %92 = vmatpush1.msra.mxu0 0.0
  %93 = vmatprep.subr.mxu0 0.0
  %94 = vmatpush1.msra.mxu0 0.0
  %95 = vmatprep.subr.mxu0 0.0
  %96 = vmatpush1.msra.mxu0 0.0
  %97 = vmatprep.subr.mxu0 0.0
  %98 = vmatpush1.msra.mxu0 0.0
  %99 = vmatprep.subr.mxu0 0.0
  %100 = vmatpush1.msra.mxu0 0.0
  %101 = vmatprep.subr.mxu0 0.0
  %102 = vmatpush1.msra.mxu0 0.0
  %103 = vmatprep.subr.mxu0 0.0
  %104 = vmatpush1.msra.mxu0 0.0
  %105 = vmatprep.subr.mxu0 0.0
  %106 = vmatpush1.msra.mxu0 0.0
  %107 = vmatprep.subr.mxu0 0.0
  %108 = vmatpush1.msra.mxu0 0.0
  %109 = vmatprep.subr.mxu0 0.0
  %110 = vmatpush1.msra.mxu0 0.0
  %111 = vmatprep.subr.mxu0 0.0
  %112 = vmatpush1.msra.mxu0 0.0
  %113 = vmatprep.subr.mxu0 0.0
  %114 = vmatpush1.msra.mxu0 0.0
  %115 = vmatprep.subr.mxu0 0.0
  %116 = vmatpush1.msra.mxu0 0.0
  %117 = vmatprep.mubr.f32.mxu0 0.0
  %118 = vmatmul.mubr.f32.gmra.mrb[0].mxu0 %v51
  %v119 = vpop.f32.mrb[0].mxu0
  %v120 = vadd.f32 %v42, %v119
  %v121 = vpop.f32.mrb[0].mxu0
  %v122 = vadd.f32 %v46, %v121
  %123 = vdwg.mxu0
  %v124 = vmax.f32 %v120, 0.0
  %v125 = vmax.f32 %v122, 0.0
  %v126 = vld [vmem:[%s3] sm:$0xff]
  %v127 = vld [vmem:[%s3 + $0x8] sm:$0xff]
  %v128 = vld [vmem:[%s3 + $0x10] sm:$0xff]
  %v129 = vld [vmem:[%s3 + $0x18] sm:$0xff]
  %v130 = vld [vmem:[%s3 + $0x20] sm:$0xff]
  %v131 = vld [vmem:[%s3 + $0x28] sm:$0xff]
  %v132 = vld [vmem:[%s3 + $0x30] sm:$0xff]
  %v133 = vld [vmem:[%s3 + $0x38] sm:$0xff]
  %v134 = vld [vmem:[%s3 + $0x40] sm:$0xff]
  %v135 = vld [vmem:[%s3 + $0x48] sm:$0xff]
  %v136 = vld [vmem:[%s3 + $0x50] sm:$0xff]
  %v137 = vld [vmem:[%s3 + $0x58] sm:$0xff]
  %v138 = vld [vmem:[%s3 + $0x60] sm:$0xff]
  %v139 = vld [vmem:[%s3 + $0x68] sm:$0xff]
  %v140 = vld [vmem:[%s3 + $0x70] sm:$0xff]
  %v141 = vld [vmem:[%s3 + $0x78] sm:$0xff]
  %v142 = vld [vmem:[%s3 + $0x80] sm:$0xff]
  %v143 = vld [vmem:[%s3 + $0x88] sm:$0xff]
  %v144 = vld [vmem:[%s3 + $0x90] sm:$0xff]
  %v145 = vld [vmem:[%s3 + $0x98] sm:$0xff]
  %v146 = vld [vmem:[%s3 + $0xa0] sm:$0xff]
  %v147 = vld [vmem:[%s3 + $0xa8] sm:$0xff]
  %v148 = vld [vmem:[%s3 + $0xb0] sm:$0xff]
  %v149 = vld [vmem:[%s3 + $0xb8] sm:$0xff]
  %v150 = vld [vmem:[%s3 + $0xc0] sm:$0xff]
  %v151 = vld [vmem:[%s3 + $0xc8] sm:$0xff]
  %v152 = vld [vmem:[%s3 + $0xd0] sm:$0xff]
  %v153 = vld [vmem:[%s3 + $0xd8] sm:$0xff]
  %v154 = vld [vmem:[%s3 + $0xe0] sm:$0xff]
  %v155 = vld [vmem:[%s3 + $0xe8] sm:$0xff]
  %v156 = vld [vmem:[%s3 + $0xf0] sm:$0xff]
  %v157 = vld [vmem:[%s3 + $0xf8] sm:$0xff]
  %v158 = vld [vmem:[%s3 + $0x100] sm:$0xff]
  %v159 = vld [vmem:[%s3 + $0x108] sm:$0xff]
  %v160 = vld [vmem:[%s3 + $0x110] sm:$0xff]
  %v161 = vld [vmem:[%s3 + $0x118] sm:$0xff]
  %v162 = vld [vmem:[%s3 + $0x120] sm:$0xff]
  %v163 = vld [vmem:[%s3 + $0x128] sm:$0xff]
  %v164 = vld [vmem:[%s3 + $0x130] sm:$0xff]
  %v165 = vld [vmem:[%s3 + $0x138] sm:$0xff]
  %v166 = vld [vmem:[%s3 + $0x140] sm:$0xff]
  %v167 = vld [vmem:[%s3 + $0x148] sm:$0xff]
  %v168 = vld [vmem:[%s3 + $0x150] sm:$0xff]
  %v169 = vld [vmem:[%s3 + $0x158] sm:$0xff]
  %v170 = vld [vmem:[%s3 + $0x160] sm:$0xff]
  %v171 = vld [vmem:[%s3 + $0x168] sm:$0xff]
  %v172 = vld [vmem:[%s3 + $0x170] sm:$0xff]
  %v173 = vld [vmem:[%s3 + $0x178] sm:$0xff]
  %v174 = vld [vmem:[%s3 + $0x180] sm:$0xff]
  %v175 = vld [vmem:[%s3 + $0x188] sm:$0xff]
  %v176 = vld [vmem:[%s3 + $0x190] sm:$0xff]
  %v177 = vld [vmem:[%s3 + $0x198] sm:$0xff]
  %v178 = vld [vmem:[%s3 + $0x1a0] sm:$0xff]
  %v179 = vld [vmem:[%s3 + $0x1a8] sm:$0xff]
  %v180 = vld [vmem:[%s3 + $0x1b0] sm:$0xff]
  %v181 = vld [vmem:[%s3 + $0x1b8] sm:$0xff]
  %v182 = vld [vmem:[%s3 + $0x1c0] sm:$0xff]
  %v183 = vld [vmem:[%s3 + $0x1c8] sm:$0xff]
  %v184 = vld [vmem:[%s3 + $0x1d0] sm:$0xff]
  %v185 = vld [vmem:[%s3 + $0x1d8] sm:$0xff]
  %v186 = vld [vmem:[%s3 + $0x1e0] sm:$0xff]
  %v187 = vld [vmem:[%s3 + $0x1e8] sm:$0xff]
  %v188 = vld [vmem:[%s3 + $0x1f0] sm:$0xff]
  %v189 = vld [vmem:[%s3 + $0x1f8] sm:$0xff]
  %v190 = vld [vmem:[%s4] sm:$0x3]
  %v192 = vlaneseq
  %v193 = vshrl.u32 %v192, 7
  %v194 = vsub.s32 0, %v193
  %v195 = vrot.slane %v190, %v194
  %v196 = vlaneseq
  %v197 = vshrl.u32 %v196, 7
  %v198 = vsub.s32 1, %v197
  %v199 = vrot.slane %v190, %v198
  %202 = vmatprep.subr.mxu0 %v127
  %203 = vmatpush1.msra.mxu0 %v126
  %204 = vmatprep.subr.mxu0 %v129
  %205 = vmatpush1.msra.mxu0 %v128
  %206 = vmatprep.subr.mxu0 %v131
  %207 = vmatpush1.msra.mxu0 %v130
  %208 = vmatprep.subr.mxu0 %v133
  %209 = vmatpush1.msra.mxu0 %v132
  %210 = vmatprep.subr.mxu0 %v135
  %211 = vmatpush1.msra.mxu0 %v134
  %212 = vmatprep.subr.mxu0 %v137
  %213 = vmatpush1.msra.mxu0 %v136
  %214 = vmatprep.subr.mxu0 %v139
  %215 = vmatpush1.msra.mxu0 %v138
  %216 = vmatprep.subr.mxu0 %v141
  %217 = vmatpush1.msra.mxu0 %v140
  %218 = vmatprep.subr.mxu0 %v143
  %219 = vmatpush1.msra.mxu0 %v142
  %220 = vmatprep.subr.mxu0 %v145
  %221 = vmatpush1.msra.mxu0 %v144
  %222 = vmatprep.subr.mxu0 %v147
  %223 = vmatpush1.msra.mxu0 %v146
  %224 = vmatprep.subr.mxu0 %v149
  %225 = vmatpush1.msra.mxu0 %v148
  %226 = vmatprep.subr.mxu0 %v151
  %227 = vmatpush1.msra.mxu0 %v150
  %228 = vmatprep.subr.mxu0 %v153
  %229 = vmatpush1.msra.mxu0 %v152
  %230 = vmatprep.subr.mxu0 %v155
  %231 = vmatpush1.msra.mxu0 %v154
  %232 = vmatprep.subr.mxu0 %v157
  %233 = vmatpush1.msra.mxu0 %v156
  %234 = vmatprep.subr.mxu0 %v159
  %235 = vmatpush1.msra.mxu0 %v158
  %236 = vmatprep.subr.mxu0 %v161
  %237 = vmatpush1.msra.mxu0 %v160
  %238 = vmatprep.subr.mxu0 %v163
  %239 = vmatpush1.msra.mxu0 %v162
  %240 = vmatprep.subr.mxu0 %v165
  %241 = vmatpush1.msra.mxu0 %v164
  %242 = vmatprep.subr.mxu0 %v167
  %243 = vmatpush1.msra.mxu0 %v166
  %244 = vmatprep.subr.mxu0 %v169
  %245 = vmatpush1.msra.mxu0 %v168
  %246 = vmatprep.subr.mxu0 %v171
  %247 = vmatpush1.msra.mxu0 %v170
  %248 = vmatprep.subr.mxu0 %v173
  %249 = vmatpush1.msra.mxu0 %v172
  %250 = vmatprep.subr.mxu0 %v175
  %251 = vmatpush1.msra.mxu0 %v174
  %252 = vmatprep.subr.mxu0 %v177
  %253 = vmatpush1.msra.mxu0 %v176
  %254 = vmatprep.subr.mxu0 %v179
  %255 = vmatpush1.msra.mxu0 %v178
  %256 = vmatprep.subr.mxu0 %v181
  %257 = vmatpush1.msra.mxu0 %v180
  %258 = vmatprep.subr.mxu0 %v183
  %259 = vmatpush1.msra.mxu0 %v182
  %260 = vmatprep.subr.mxu0 %v185
  %261 = vmatpush1.msra.mxu0 %v184
  %262 = vmatprep.subr.mxu0 %v187
  %263 = vmatpush1.msra.mxu0 %v186
  %264 = vmatprep.subr.mxu0 %v189
  %265 = vmatpush1.msra.mxu0 %v188
  %266 = vmatprep.mubr.f32.mxu0 %v125
  %267 = vmatmul.mubr.f32.gmra.mrb[0].mxu0 %v124
  %v268 = vpop.f32.mrb[0].mxu0
  %v269 = vadd.f32 %v195, %v268
  %v270 = vpop.f32.mrb[0].mxu0
  %v271 = vadd.f32 %v199, %v270
  %272 = vdwg.mxu0
  %v273 = vmax.f32 %v269, 0.0
  %v274 = vmax.f32 %v271, 0.0
  %v275 = vld [vmem:[%s5] sm:$0xff]
  %v276 = vld [vmem:[%s5 + $0x8] sm:$0xff]
  %v277 = vld [vmem:[%s5 + $0x10] sm:$0xff]
  %v278 = vld [vmem:[%s5 + $0x18] sm:$0xff]
  %v279 = vld [vmem:[%s5 + $0x20] sm:$0xff]
  %v280 = vld [vmem:[%s5 + $0x28] sm:$0xff]
  %v281 = vld [vmem:[%s5 + $0x30] sm:$0xff]
  %v282 = vld [vmem:[%s5 + $0x38] sm:$0xff]
  %v283 = vld [vmem:[%s5 + $0x40] sm:$0xff]
  %v284 = vld [vmem:[%s5 + $0x48] sm:$0xff]
  %v285 = vld [vmem:[%s5 + $0x50] sm:$0xff]
  %v286 = vld [vmem:[%s5 + $0x58] sm:$0xff]
  %v287 = vld [vmem:[%s5 + $0x60] sm:$0xff]
  %v288 = vld [vmem:[%s5 + $0x68] sm:$0xff]
  %v289 = vld [vmem:[%s5 + $0x70] sm:$0xff]
  %v290 = vld [vmem:[%s5 + $0x78] sm:$0xff]
  %v291 = vld [vmem:[%s5 + $0x80] sm:$0xff]
  %v292 = vld [vmem:[%s5 + $0x88] sm:$0xff]
  %v293 = vld [vmem:[%s5 + $0x90] sm:$0xff]
  %v294 = vld [vmem:[%s5 + $0x98] sm:$0xff]
  %v295 = vld [vmem:[%s5 + $0xa0] sm:$0xff]
  %v296 = vld [vmem:[%s5 + $0xa8] sm:$0xff]
  %v297 = vld [vmem:[%s5 + $0xb0] sm:$0xff]
  %v298 = vld [vmem:[%s5 + $0xb8] sm:$0xff]
  %v299 = vld [vmem:[%s5 + $0xc0] sm:$0xff]
  %v300 = vld [vmem:[%s5 + $0xc8] sm:$0xff]
  %v301 = vld [vmem:[%s5 + $0xd0] sm:$0xff]
  %v302 = vld [vmem:[%s5 + $0xd8] sm:$0xff]
  %v303 = vld [vmem:[%s5 + $0xe0] sm:$0xff]
  %v304 = vld [vmem:[%s5 + $0xe8] sm:$0xff]
  %v305 = vld [vmem:[%s5 + $0xf0] sm:$0xff]
  %v306 = vld [vmem:[%s5 + $0xf8] sm:$0xff]
  %v307 = vld [vmem:[%s6] sm:$0x1]
  %v309 = vlaneseq
  %v310 = vshrl.u32 %v309, 7
  %v311 = vsub.s32 0, %v310
  %v312 = vrot.slane %v307, %v311
  %314 = vmatprep.subr.mxu0 0.0
  %315 = vmatpush1.msra.mxu0 %v275
  %316 = vmatprep.subr.mxu0 0.0
  %317 = vmatpush1.msra.mxu0 %v276
  %318 = vmatprep.subr.mxu0 0.0
  %319 = vmatpush1.msra.mxu0 %v277
  %320 = vmatprep.subr.mxu0 0.0
  %321 = vmatpush1.msra.mxu0 %v278
  %322 = vmatprep.subr.mxu0 0.0
  %323 = vmatpush1.msra.mxu0 %v279
  %324 = vmatprep.subr.mxu0 0.0
  %325 = vmatpush1.msra.mxu0 %v280
  %326 = vmatprep.subr.mxu0 0.0
  %327 = vmatpush1.msra.mxu0 %v281
  %328 = vmatprep.subr.mxu0 0.0
  %329 = vmatpush1.msra.mxu0 %v282
  %330 = vmatprep.subr.mxu0 0.0
  %331 = vmatpush1.msra.mxu0 %v283
  %332 = vmatprep.subr.mxu0 0.0
  %333 = vmatpush1.msra.mxu0 %v284
  %334 = vmatprep.subr.mxu0 0.0
  %335 = vmatpush1.msra.mxu0 %v285
  %336 = vmatprep.subr.mxu0 0.0
  %337 = vmatpush1.msra.mxu0 %v286
  %338 = vmatprep.subr.mxu0 0.0
  %339 = vmatpush1.msra.mxu0 %v287
  %340 = vmatprep.subr.mxu0 0.0
  %341 = vmatpush1.msra.mxu0 %v288
  %342 = vmatprep.subr.mxu0 0.0
  %343 = vmatpush1.msra.mxu0 %v289
  %344 = vmatprep.subr.mxu0 0.0
  %345 = vmatpush1.msra.mxu0 %v290
  %346 = vmatprep.subr.mxu0 0.0
  %347 = vmatpush1.msra.mxu0 %v291
  %348 = vmatprep.subr.mxu0 0.0
  %349 = vmatpush1.msra.mxu0 %v292
  %350 = vmatprep.subr.mxu0 0.0
  %351 = vmatpush1.msra.mxu0 %v293
  %352 = vmatprep.subr.mxu0 0.0
  %353 = vmatpush1.msra.mxu0 %v294
  %354 = vmatprep.subr.mxu0 0.0
  %355 = vmatpush1.msra.mxu0 %v295
  %356 = vmatprep.subr.mxu0 0.0
  %357 = vmatpush1.msra.mxu0 %v296
  %358 = vmatprep.subr.mxu0 0.0
  %359 = vmatpush1.msra.mxu0 %v297
  %360 = vmatprep.subr.mxu0 0.0
  %361 = vmatpush1.msra.mxu0 %v298
  %362 = vmatprep.subr.mxu0 0.0
  %363 = vmatpush1.msra.mxu0 %v299
  %364 = vmatprep.subr.mxu0 0.0
  %365 = vmatpush1.msra.mxu0 %v300
  %366 = vmatprep.subr.mxu0 0.0
  %367 = vmatpush1.msra.mxu0 %v301
  %368 = vmatprep.subr.mxu0 0.0
  %369 = vmatpush1.msra.mxu0 %v302
  %370 = vmatprep.subr.mxu0 0.0
  %371 = vmatpush1.msra.mxu0 %v303
  %372 = vmatprep.subr.mxu0 0.0
  %373 = vmatpush1.msra.mxu0 %v304
  %374 = vmatprep.subr.mxu0 0.0
  %375 = vmatpush1.msra.mxu0 %v305
  %376 = vmatprep.subr.mxu0 0.0
  %377 = vmatpush1.msra.mxu0 %v306
  %378 = vmatprep.mubr.f32.mxu0 %v274
  %379 = vmatmul.mubr.f32.gmra.mrb[0].mxu0 %v273
  %v380 = vpop.f32.mrb[0].mxu0
  %v381 = vadd.f32 %v312, %v380
  %v382 = vpop.f32.mrb[0].mxu0
  %383 = vdwg.mxu0
  %v384 = vld [vmem:[%s7] sm:$0x1]
  %v385 = vmul.f32 %v384, 1.442695
  %v386 = vpow.pop %v385
  %v387 = vld [vmem:[%s8] sm:$0xff]
  %v389 = vlaneseq
  %v390 = vshrl.u32 %v389, 7
  %v391 = vsub.s32 0, %v390
  %v392 = vrot.slane %v386, %v391
  %v394 = vmul.f32 %v387, %v392
  %v395 = vadd.f32 %v381, %v394
  %396 = vst [vmem:[%s9] sm:$0xff] %v395
  // Predicated region
  $region38: #{policy_forward.1} parent=0 // pred_check
    _
  $region39: #{policy_forward.1} parent=0 // pred_check_branch
    %398 = sbr.rel (0) target = $region41
  $region40: #{policy_forward.1} parent=0 // pred_region
    _
  $region41: #{policy_forward.1} parent=0 // pred_fallthru
    _
  // Predicated region
  $region42: #{policy_forward.1} parent=0 // pred_check
    _
  $region43: #{policy_forward.1} parent=0 // pred_check_branch
    %400 = sbr.rel (0) target = $region45
  $region44: #{policy_forward.1} parent=0 // pred_region
    _
  $region45: #{policy_forward.1} parent=0 // pred_fallthru
    _

</llo_original>
